<compile_context>
chip_gen: v5e
topology: v5e:2x2
jax: 0.10.0
libtpu: 0.0.40
codegen_flags: <defaults>
</compile_context>

<pallas_src>
import functools

import jax
import jax.numpy as jnp
from jax.experimental import pallas as pl
from jax.experimental.pallas import tpu as pltpu


def _round_up(n, m):
    return ((n + m - 1) // m) * m


def _soft_q_kernel(s_ref, a_ref, w1s_ref, w1a_ref, b1_ref, w2_ref, b2_ref,
                   w3_ref, b3_ref, o_ref):
    # Fused concat: layer 1 = state @ W1_s + action @ W1_a + b1
    # (bf16 MXU operands, f32 accumulation; bias/ReLU on the VPU in f32).
    s = s_ref[...].astype(jnp.bfloat16)
    a = a_ref[...].astype(jnp.bfloat16)
    h1 = (jnp.dot(s, w1s_ref[...], preferred_element_type=jnp.float32)
          + jnp.dot(a, w1a_ref[...], preferred_element_type=jnp.float32)
          + b1_ref[...])
    h1 = jnp.maximum(h1, 0.0)

    # Layer 2: Linear + ReLU.
    h2 = jnp.dot(h1.astype(jnp.bfloat16), w2_ref[...],
                 preferred_element_type=jnp.float32) + b2_ref[...]
    h2 = jnp.maximum(h2, 0.0)

    # Layer 3: output dim 1 -> XLU lane reduction against the (1, H) w3 row,
    # then a lane-dense (1, 1, tb) store (no masked last-dim-1 column stores).
    q = jnp.sum(h2 * w3_ref[...], axis=-1) + b3_ref[0, 0]      # (tb,)
    o_ref[...] = q.reshape(o_ref.shape)


def _choose_tb(B, block_b):
    """Batch tile: as few grid steps as possible, but >= 2 steps when the
    batch allows it so v7x can shard the 'parallel' axis over both TCs."""
    if B <= 8:
        return 8
    tb = _round_up(-(-B // 2), 8)          # ~2 grid steps
    return max(8, min(tb, block_b))


@functools.partial(jax.jit, static_argnames=("block_b",))
def soft_q_forward(state, action, params, block_b=1024):
    """Pallas forward of SoftQNetwork. Returns (B, 1) Q-values (float32).

    `params` are expected in the dtypes produced by `init_params` (matmul
    weights bf16, biases f32) so no conversions happen per call.
    """
    w1s, w1a, b1, w2, b2, w3, b3 = params

    B, state_dim = state.shape
    _, action_dim = action.shape
    H = w1s.shape[1]

    tb = _choose_tb(B, block_b)
    num_blocks = pl.cdiv(B, tb)            # ragged last block handled by Pallas
    grid = (num_blocks,)

    def batch_spec(d):
        return pl.BlockSpec((tb, d), lambda i: (i, 0))

    def resident(shape):
        # Constant block index -> stays resident in VMEM across the whole grid.
        return pl.BlockSpec(shape, lambda i: (0, 0))

    out = pl.pallas_call(
        _soft_q_kernel,
        out_shape=jax.ShapeDtypeStruct((num_blocks, 1, tb), jnp.float32),
        grid=grid,
        in_specs=[
            batch_spec(state_dim),                                # state tile
            batch_spec(action_dim),                               # action tile
            resident((state_dim, H)),                             # W1[:state_dim]
            resident((action_dim, H)),                            # W1[state_dim:]
            resident((1, H)),                                     # b1
            resident((H, H)),                                     # W2
            resident((1, H)),                                     # b2
            resident((1, H)),                                     # w3 as a row
            pl.BlockSpec(memory_space=pltpu.MemorySpace.SMEM),    # b3 scalar
        ],
        out_specs=pl.BlockSpec((1, 1, tb), lambda i: (i, 0, 0)),  # lane-dense Q
        compiler_params=pltpu.CompilerParams(
            dimension_semantics=("parallel",),   # batch-parallel (v7x: 2 TCs)
        ),
    )(state, action, w1s, w1a, b1, w2, b2, w3, b3)

    # (num_blocks, 1, tb) lane-dense -> (B, 1); padded/garbage rows trimmed.
    return out.reshape(-1)[:B].reshape(B, 1)


def init_params(key, state_dim, action_dim, hidden_dim=256):
    """Init mirroring nn.Linear, stored in kernel dtypes once:
    matmul weights bf16 (transposed (in, out), W1 pre-split), biases f32,
    w3 as a (1, H) f32 row, b3 as a (1, 1) f32 scalar."""
    d_in = state_dim + action_dim
    k1, k2, k3, k4, k5, k6 = jax.random.split(key, 6)

    def uniform(k, shape, fan_in):
        bound = 1.0 / jnp.sqrt(fan_in)
        return jax.random.uniform(k, shape, jnp.float32, -bound, bound)

    w1 = uniform(k1, (d_in, hidden_dim), d_in)
    w1s = w1[:state_dim].astype(jnp.bfloat16)          # fused-concat split
    w1a = w1[state_dim:].astype(jnp.bfloat16)
    b1 = uniform(k2, (1, hidden_dim), d_in)
    w2 = uniform(k3, (hidden_dim, hidden_dim), hidden_dim).astype(jnp.bfloat16)
    b2 = uniform(k4, (1, hidden_dim), hidden_dim)
    w3 = uniform(k5, (1, hidden_dim), hidden_dim)       # (1, H) row, f32
    b3 = uniform(k6, (1, 1), hidden_dim)                 # scalar, f32 (SMEM)
    return (w1s, w1a, b1, w2, b2, w3, b3)


def _reference(state, action, params):
    """Plain-JAX f32 reference of the PyTorch forward (weights upcast)."""
    w1s, w1a, b1, w2, b2, w3, b3 = params
    w1 = jnp.concatenate([w1s, w1a], axis=0).astype(jnp.float32)
    x = jnp.concatenate([state, action], axis=1)
    x = jnp.maximum(x @ w1 + b1, 0.0)
    x = jnp.maximum(x @ w2.astype(jnp.float32) + b2, 0.0)
    return x @ w3.astype(jnp.float32).T + b3


if __name__ == "__main__":
    # Small, module-consistent shapes; B=16 exercises the 2-step grid path.
    B, STATE_DIM, ACTION_DIM, HIDDEN = 16, 8, 4, 32

    key = jax.random.PRNGKey(0)
    k_s, k_a, k_p = jax.random.split(key, 3)
    state = jax.random.normal(k_s, (B, STATE_DIM), jnp.float32)
    action = jax.random.normal(k_a, (B, ACTION_DIM), jnp.float32)
    params = init_params(k_p, STATE_DIM, ACTION_DIM, HIDDEN)

    q = soft_q_forward(state, action, params)
    q = jax.block_until_ready(q)

    q_ref = _reference(state, action, params)
    assert q.shape == (B, 1), q.shape
    # bf16 matmul operands (f32 accumulation) -> loosened tolerance vs f32 ref.
    assert jnp.allclose(q, q_ref, atol=3e-2, rtol=3e-2), "mismatch vs reference"

    print("KERNEL_OK")
</pallas_src>

<mosaic_0001>
module attributes {stable_mosaic.version = 11 : i64} {
  func.func @_soft_q_kernel(%arg0: i32, %arg1: memref<8x8xf32, #tpu.memory_space<vmem>>, %arg2: memref<8x4xf32, #tpu.memory_space<vmem>>, %arg3: memref<8x32xbf16, #tpu.memory_space<vmem>>, %arg4: memref<4x32xbf16, #tpu.memory_space<vmem>>, %arg5: memref<1x32xf32, #tpu.memory_space<vmem>>, %arg6: memref<32x32xbf16, #tpu.memory_space<vmem>>, %arg7: memref<1x32xf32, #tpu.memory_space<vmem>>, %arg8: memref<1x32xf32, #tpu.memory_space<vmem>>, %arg9: memref<1x1xf32, #tpu.memory_space<smem>>, %arg10: memref<1x1x8xf32, #tpu.memory_space<vmem>>) attributes {dimension_semantics = [#tpu.dimension_semantics<parallel>], iteration_bounds = array<i64: 2>, scalar_prefetch = 0 : i64, scratch_operands = 0 : i64, tpu.core_type = #tpu.core_type<tc>, window_params = [{transform_indices = @transform_0, window_bounds = array<i64: 8, 8>}, {transform_indices = @transform_1, window_bounds = array<i64: 8, 4>}, {pipeline_mode = #tpu.pipeline_mode<synchronous>, transform_indices = @transform_2, window_bounds = array<i64: 8, 32>}, {pipeline_mode = #tpu.pipeline_mode<synchronous>, transform_indices = @transform_3, window_bounds = array<i64: 4, 32>}, {pipeline_mode = #tpu.pipeline_mode<synchronous>, transform_indices = @transform_4, window_bounds = array<i64: 1, 32>}, {pipeline_mode = #tpu.pipeline_mode<synchronous>, transform_indices = @transform_5, window_bounds = array<i64: 32, 32>}, {pipeline_mode = #tpu.pipeline_mode<synchronous>, transform_indices = @transform_6, window_bounds = array<i64: 1, 32>}, {pipeline_mode = #tpu.pipeline_mode<synchronous>, transform_indices = @transform_7, window_bounds = array<i64: 1, 32>}, {transform_indices = @transform_8, window_bounds = array<i64: 1, 1>}, {transform_indices = @transform_9, window_bounds = array<i64: 1, 1, 8>}]} {
    %c0 = arith.constant 0 : index
    %c0_0 = arith.constant 0 : index
    %0 = vector.load %arg1[%c0, %c0_0] : memref<8x8xf32, #tpu.memory_space<vmem>>, vector<8x8xf32>
    %1 = arith.truncf %0 : vector<8x8xf32> to vector<8x8xbf16>
    %c0_1 = arith.constant 0 : index
    %c0_2 = arith.constant 0 : index
    %2 = vector.load %arg2[%c0_1, %c0_2] : memref<8x4xf32, #tpu.memory_space<vmem>>, vector<8x4xf32>
    %3 = arith.truncf %2 : vector<8x4xf32> to vector<8x4xbf16>
    %c0_3 = arith.constant 0 : index
    %c0_4 = arith.constant 0 : index
    %4 = vector.load %arg3[%c0_3, %c0_4] : memref<8x32xbf16, #tpu.memory_space<vmem>>, vector<8x32xbf16>
    %cst = arith.constant dense<0.000000e+00> : vector<8x32xf32>
    %5 = tpu.matmul %1, %4, %cst {dimension_numbers = #tpu.dot_dimension_numbers<[1], [0], [0], [1], [0, 0, 1, 1], [], []>} : vector<8x8xbf16>, vector<8x32xbf16>, vector<8x32xf32> -> vector<8x32xf32>
    %c0_5 = arith.constant 0 : index
    %c0_6 = arith.constant 0 : index
    %6 = vector.load %arg4[%c0_5, %c0_6] : memref<4x32xbf16, #tpu.memory_space<vmem>>, vector<4x32xbf16>
    %cst_7 = arith.constant dense<0.000000e+00> : vector<8x32xf32>
    %7 = tpu.matmul %3, %6, %cst_7 {dimension_numbers = #tpu.dot_dimension_numbers<[1], [0], [0], [1], [0, 0, 1, 1], [], []>} : vector<8x4xbf16>, vector<4x32xbf16>, vector<8x32xf32> -> vector<8x32xf32>
    %8 = arith.addf %5, %7 : vector<8x32xf32>
    %c0_8 = arith.constant 0 : index
    %c0_9 = arith.constant 0 : index
    %9 = vector.load %arg5[%c0_8, %c0_9] : memref<1x32xf32, #tpu.memory_space<vmem>>, vector<1x32xf32>
    %10 = vector.broadcast %9 : vector<1x32xf32> to vector<8x32xf32>
    %11 = arith.addf %8, %10 : vector<8x32xf32>
    %cst_10 = arith.constant 0.000000e+00 : f32
    %12 = vector.broadcast %cst_10 : f32 to vector<8x32xf32>
    %13 = arith.maximumf %11, %12 : vector<8x32xf32>
    %14 = arith.truncf %13 : vector<8x32xf32> to vector<8x32xbf16>
    %c0_11 = arith.constant 0 : index
    %c0_12 = arith.constant 0 : index
    %15 = vector.load %arg6[%c0_11, %c0_12] : memref<32x32xbf16, #tpu.memory_space<vmem>>, vector<32x32xbf16>
    %cst_13 = arith.constant dense<0.000000e+00> : vector<8x32xf32>
    %16 = tpu.matmul %14, %15, %cst_13 {dimension_numbers = #tpu.dot_dimension_numbers<[1], [0], [0], [1], [0, 0, 1, 1], [], []>} : vector<8x32xbf16>, vector<32x32xbf16>, vector<8x32xf32> -> vector<8x32xf32>
    %c0_14 = arith.constant 0 : index
    %c0_15 = arith.constant 0 : index
    %17 = vector.load %arg7[%c0_14, %c0_15] : memref<1x32xf32, #tpu.memory_space<vmem>>, vector<1x32xf32>
    %18 = vector.broadcast %17 : vector<1x32xf32> to vector<8x32xf32>
    %19 = arith.addf %16, %18 : vector<8x32xf32>
    %cst_16 = arith.constant 0.000000e+00 : f32
    %20 = vector.broadcast %cst_16 : f32 to vector<8x32xf32>
    %21 = arith.maximumf %19, %20 : vector<8x32xf32>
    %c0_17 = arith.constant 0 : index
    %c0_18 = arith.constant 0 : index
    %22 = vector.load %arg8[%c0_17, %c0_18] : memref<1x32xf32, #tpu.memory_space<vmem>>, vector<1x32xf32>
    %23 = vector.broadcast %22 : vector<1x32xf32> to vector<8x32xf32>
    %24 = arith.mulf %21, %23 : vector<8x32xf32>
    %cst_19 = arith.constant dense<0.000000e+00> : vector<8xf32>
    %25 = vector.multi_reduction <add>, %24, %cst_19 [1] : vector<8x32xf32> to vector<8xf32>
    %c0_20 = arith.constant 0 : index
    %c0_21 = arith.constant 0 : index
    %26 = memref.load %arg9[%c0_20, %c0_21] : memref<1x1xf32, #tpu.memory_space<smem>>
    %27 = vector.broadcast %26 : f32 to vector<8xf32>
    %28 = arith.addf %25, %27 : vector<8xf32>
    %29 = vector.shape_cast %28 : vector<8xf32> to vector<1x1x8xf32>
    %c0_22 = arith.constant 0 : index
    %c0_23 = arith.constant 0 : index
    %c0_24 = arith.constant 0 : index
    %30 = vector.load %arg10[%c0_22, %c0_23, %c0_24] : memref<1x1x8xf32, #tpu.memory_space<vmem>>, vector<1x1x8xf32>
    tpu.vector_store %arg10[%c0_22, %c0_23, %c0_24], %29 {strides = array<i32>} : memref<1x1x8xf32, #tpu.memory_space<vmem>>, vector<1x1x8xf32>,
    return
  }
  func.func @transform_0(%arg0: i32) -> (i32, i32) {
    %c0_i32 = arith.constant 0 : i32
    %c0_i32_0 = arith.constant 0 : i32
    return %arg0, %c0_i32 : i32, i32
  }
  func.func @transform_1(%arg0: i32) -> (i32, i32) {
    %c0_i32 = arith.constant 0 : i32
    %c0_i32_0 = arith.constant 0 : i32
    return %arg0, %c0_i32 : i32, i32
  }
  func.func @transform_2(%arg0: i32) -> (i32, i32) {
    %c0_i32 = arith.constant 0 : i32
    %c0_i32_0 = arith.constant 0 : i32
    %c0_i32_1 = arith.constant 0 : i32
    return %c0_i32, %c0_i32_0 : i32, i32
  }
  func.func @transform_3(%arg0: i32) -> (i32, i32) {
    %c0_i32 = arith.constant 0 : i32
    %c0_i32_0 = arith.constant 0 : i32
    %c0_i32_1 = arith.constant 0 : i32
    return %c0_i32, %c0_i32_0 : i32, i32
  }
  func.func @transform_4(%arg0: i32) -> (i32, i32) {
    %c0_i32 = arith.constant 0 : i32
    %c0_i32_0 = arith.constant 0 : i32
    %c0_i32_1 = arith.constant 0 : i32
    return %c0_i32, %c0_i32_0 : i32, i32
  }
  func.func @transform_5(%arg0: i32) -> (i32, i32) {
    %c0_i32 = arith.constant 0 : i32
    %c0_i32_0 = arith.constant 0 : i32
    %c0_i32_1 = arith.constant 0 : i32
    return %c0_i32, %c0_i32_0 : i32, i32
  }
  func.func @transform_6(%arg0: i32) -> (i32, i32) {
    %c0_i32 = arith.constant 0 : i32
    %c0_i32_0 = arith.constant 0 : i32
    %c0_i32_1 = arith.constant 0 : i32
    return %c0_i32, %c0_i32_0 : i32, i32
  }
  func.func @transform_7(%arg0: i32) -> (i32, i32) {
    %c0_i32 = arith.constant 0 : i32
    %c0_i32_0 = arith.constant 0 : i32
    %c0_i32_1 = arith.constant 0 : i32
    return %c0_i32, %c0_i32_0 : i32, i32
  }
  func.func @transform_8(%arg0: i32) -> (i32, i32) {
    %c0_i32 = arith.constant 0 : i32
    %c0_i32_0 = arith.constant 0 : i32
    %c0_i32_1 = arith.constant 0 : i32
    return %c0_i32, %c0_i32_0 : i32, i32
  }
  func.func @transform_9(%arg0: i32) -> (i32, i32, i32) {
    %c0_i32 = arith.constant 0 : i32
    %c0_i32_0 = arith.constant 0 : i32
    %c0_i32_1 = arith.constant 0 : i32
    return %arg0, %c0_i32, %c0_i32_0 : i32, i32, i32
  }
}

</mosaic_0001>

<llo_original>
// kernel: soft_q_forward.1
$region0: #{soft_q_forward.1}
  #allocation0 [shape = 'u32[]', space=smem, size = 0x4, offset = 0x4, fixed_abs, tag = 'smem constant byte address 0x4 - core index']
  #allocation1 [shape = 'u32[72,128]{1,0:T(1,128)}', space=vmem, size = 0x9000, scoped, tag = 'internal scratch']
  #allocation2 [shape = 'f32[1,1]{1,0:T(1,128)S(6)}', space=smem, size = 0x200, scoped, tag = 'scoped memory for soft_q_forward.1']
  %s0 = inlined_call_operand.vmem [shape: f32[16,8], index: 0, kind: input, shape index: {}]
  %s1 = inlined_call_operand.vmem [shape: f32[16,4], index: 1, kind: input, shape index: {}]
  %s2 = inlined_call_operand.vmem [shape: bf16[8,32], index: 2, kind: input, shape index: {}]
  %s3 = inlined_call_operand.vmem [shape: bf16[4,32], index: 3, kind: input, shape index: {}]
  %s4 = inlined_call_operand.vmem [shape: f32[1,32], index: 4, kind: input, shape index: {}]
  %s5 = inlined_call_operand.vmem [shape: bf16[32,32], index: 5, kind: input, shape index: {}]
  %s6 = inlined_call_operand.vmem [shape: f32[1,32], index: 6, kind: input, shape index: {}]
  %s7 = inlined_call_operand.vmem [shape: f32[1,32], index: 7, kind: input, shape index: {}]
  %s8 = inlined_call_operand.<no memory space> [shape: f32[1,1], index: 8, kind: input, shape index: {}]
  %s9 = inlined_call_operand.vmem [shape: f32[2,1,8], index: 9, kind: output, shape index: {}]
  %s10 = sld [smem:[#allocation0]]
  $region69: #{soft_q_forward.1} parent=0
    _
  %s12 = ssub.s32 1, %s10
  %s13 = scalar_select 0, %s12, %s10
  %14 = sst [smem:[#allocation2]] %s8
  loop: start=0, step=1, limit=4
  $region2: #{soft_q_forward.1} parent=0 // loop_pre_header
    _
  $region3: #{soft_q_forward.1} parent=0 // loop_header
    %s16 = sphi 0, %s20
    %p17 = scmp.ge.s32.totalorder %s16, 4
    %s26 = sphi 0, %s28
    %s29 = sphi 0, %s26
    %s30 = sphi 0, %s29
    %s46 = sphi 0, %s30
    %s52 = sphi 0, %s54
    %s55 = sphi 0, %s52
    %s56 = sphi 0, %s55
    %s72 = sphi 0, %s56
    %s76 = sphi 0, %s76
    %s78 = sphi 0, %s76
    %s79 = sphi 0, %s78
    %s93 = sphi 0, %s79
    %s97 = sphi 0, %s97
    %s99 = sphi 0, %s97
    %s100 = sphi 0, %s99
    %s114 = sphi 0, %s100
    %s118 = sphi 0, %s118
    %s120 = sphi 0, %s118
    %s121 = sphi 0, %s120
    %s135 = sphi 0, %s121
    %s139 = sphi 0, %s139
    %s141 = sphi 0, %s139
    %s142 = sphi 0, %s141
    %s156 = sphi 0, %s142
    %s160 = sphi 0, %s160
    %s162 = sphi 0, %s160
    %s163 = sphi 0, %s162
    %s177 = sphi 0, %s163
    %s181 = sphi 0, %s181
    %s183 = sphi 0, %s181
    %s184 = sphi 0, %s183
    %s198 = sphi 0, %s184
    %s202 = sphi 0, %s202
    %s204 = sphi 0, %s202
    %s205 = sphi 0, %s204
    %s219 = sphi 0, %s205
    %s225 = sphi 0, %s227
    %s228 = sphi 0, %s225
    %s229 = sphi 0, %s228
    %s245 = sphi 0, %s229
  $region4: #{soft_q_forward.1} parent=0 // loop_header_branch
    %19 = sbr.rel (%p17) target = $region8
  $region5: #{soft_q_forward.1} parent=0 // loop_body
    %s21 = ssub.s32 %s16, 1
    %s22 = ssub.s32 %s16, 2
    %s23 = sadd.s32 %s16, 1
    %s24 = ssub.s32 %s16, %s23
    %p25 = scmp.eq.s32.totalorder %s24, 0
    %s27 = sadd.s32 %s26, 1
    %s28 = scalar_select %p25, %s26, %s27
    %p31 = pneg %p25
    %p32 = scmp.eq.s32.totalorder %s16, 1
    %p33 = por %p31, %p32
    %p34 = scmp.ne.s32.totalorder %s26, %s29
    %p35 = scmp.eq.s32.totalorder %s16, 0
    %p36 = por %p34, %p35
    %p37 = scmp.ne.s32.totalorder %s26, %s29
    %p38 = scmp.eq.s32.totalorder %s21, 1
    %p39 = por %p37, %p38
    %p40 = scmp.ne.s32.totalorder %s29, %s30
    %p41 = scmp.eq.s32.totalorder %s21, 0
    %p42 = por %p40, %p41
    %p43 = scmp.ne.s32.totalorder %s29, %s30
    %p44 = scmp.eq.s32.totalorder %s22, 1
    %p45 = por %p43, %p44
    %p47 = scmp.ne.s32.totalorder %s30, %s46
    %p48 = scmp.eq.s32.totalorder %s22, 0
    %p49 = por %p47, %p48
    %s50 = ssub.s32 %s16, %s23
    %p51 = scmp.eq.s32.totalorder %s50, 0
    %s53 = sadd.s32 %s52, 1
    %s54 = scalar_select %p51, %s52, %s53
    %p57 = pneg %p51
    %p58 = scmp.eq.s32.totalorder %s16, 1
    %p59 = por %p57, %p58
    %p60 = scmp.ne.s32.totalorder %s52, %s55
    %p61 = scmp.eq.s32.totalorder %s16, 0
    %p62 = por %p60, %p61
    %p63 = scmp.ne.s32.totalorder %s52, %s55
    %p64 = scmp.eq.s32.totalorder %s21, 1
    %p65 = por %p63, %p64
    %p66 = scmp.ne.s32.totalorder %s55, %s56
    %p67 = scmp.eq.s32.totalorder %s21, 0
    %p68 = por %p66, %p67
    %p69 = scmp.ne.s32.totalorder %s55, %s56
    %p70 = scmp.eq.s32.totalorder %s22, 1
    %p71 = por %p69, %p70
    %p73 = scmp.ne.s32.totalorder %s56, %s72
    %p74 = scmp.eq.s32.totalorder %s22, 0
    %p75 = por %p73, %p74
    %s77 = sadd.s32 %s76, 1
    %p80 = scmp.eq.s32.totalorder %s16, 1
    %p81 = scmp.ne.s32.totalorder %s76, %s78
    %p82 = scmp.eq.s32.totalorder %s16, 0
    %p83 = por %p81, %p82
    %p84 = scmp.ne.s32.totalorder %s76, %s78
    %p85 = scmp.eq.s32.totalorder %s21, 1
    %p86 = por %p84, %p85
    %p87 = scmp.ne.s32.totalorder %s78, %s79
    %p88 = scmp.eq.s32.totalorder %s21, 0
    %p89 = por %p87, %p88
    %p90 = scmp.ne.s32.totalorder %s78, %s79
    %p91 = scmp.eq.s32.totalorder %s22, 1
    %p92 = por %p90, %p91
    %p94 = scmp.ne.s32.totalorder %s79, %s93
    %p95 = scmp.eq.s32.totalorder %s22, 0
    %p96 = por %p94, %p95
    %s98 = sadd.s32 %s97, 1
    %p101 = scmp.eq.s32.totalorder %s16, 1
    %p102 = scmp.ne.s32.totalorder %s97, %s99
    %p103 = scmp.eq.s32.totalorder %s16, 0
    %p104 = por %p102, %p103
    %p105 = scmp.ne.s32.totalorder %s97, %s99
    %p106 = scmp.eq.s32.totalorder %s21, 1
    %p107 = por %p105, %p106
    %p108 = scmp.ne.s32.totalorder %s99, %s100
    %p109 = scmp.eq.s32.totalorder %s21, 0
    %p110 = por %p108, %p109
    %p111 = scmp.ne.s32.totalorder %s99, %s100
    %p112 = scmp.eq.s32.totalorder %s22, 1
    %p113 = por %p111, %p112
    %p115 = scmp.ne.s32.totalorder %s100, %s114
    %p116 = scmp.eq.s32.totalorder %s22, 0
    %p117 = por %p115, %p116
    %s119 = sadd.s32 %s118, 1
    %p122 = scmp.eq.s32.totalorder %s16, 1
    %p123 = scmp.ne.s32.totalorder %s118, %s120
    %p124 = scmp.eq.s32.totalorder %s16, 0
    %p125 = por %p123, %p124
    %p126 = scmp.ne.s32.totalorder %s118, %s120
    %p127 = scmp.eq.s32.totalorder %s21, 1
    %p128 = por %p126, %p127
    %p129 = scmp.ne.s32.totalorder %s120, %s121
    %p130 = scmp.eq.s32.totalorder %s21, 0
    %p131 = por %p129, %p130
    %p132 = scmp.ne.s32.totalorder %s120, %s121
    %p133 = scmp.eq.s32.totalorder %s22, 1
    %p134 = por %p132, %p133
    %p136 = scmp.ne.s32.totalorder %s121, %s135
    %p137 = scmp.eq.s32.totalorder %s22, 0
    %p138 = por %p136, %p137
    %s140 = sadd.s32 %s139, 1
    %p143 = scmp.eq.s32.totalorder %s16, 1
    %p144 = scmp.ne.s32.totalorder %s139, %s141
    %p145 = scmp.eq.s32.totalorder %s16, 0
    %p146 = por %p144, %p145
    %p147 = scmp.ne.s32.totalorder %s139, %s141
    %p148 = scmp.eq.s32.totalorder %s21, 1
    %p149 = por %p147, %p148
    %p150 = scmp.ne.s32.totalorder %s141, %s142
    %p151 = scmp.eq.s32.totalorder %s21, 0
    %p152 = por %p150, %p151
    %p153 = scmp.ne.s32.totalorder %s141, %s142
    %p154 = scmp.eq.s32.totalorder %s22, 1
    %p155 = por %p153, %p154
    %p157 = scmp.ne.s32.totalorder %s142, %s156
    %p158 = scmp.eq.s32.totalorder %s22, 0
    %p159 = por %p157, %p158
    %s161 = sadd.s32 %s160, 1
    %p164 = scmp.eq.s32.totalorder %s16, 1
    %p165 = scmp.ne.s32.totalorder %s160, %s162
    %p166 = scmp.eq.s32.totalorder %s16, 0
    %p167 = por %p165, %p166
    %p168 = scmp.ne.s32.totalorder %s160, %s162
    %p169 = scmp.eq.s32.totalorder %s21, 1
    %p170 = por %p168, %p169
    %p171 = scmp.ne.s32.totalorder %s162, %s163
    %p172 = scmp.eq.s32.totalorder %s21, 0
    %p173 = por %p171, %p172
    %p174 = scmp.ne.s32.totalorder %s162, %s163
    %p175 = scmp.eq.s32.totalorder %s22, 1
    %p176 = por %p174, %p175
    %p178 = scmp.ne.s32.totalorder %s163, %s177
    %p179 = scmp.eq.s32.totalorder %s22, 0
    %p180 = por %p178, %p179
    %s182 = sadd.s32 %s181, 1
    %p185 = scmp.eq.s32.totalorder %s16, 1
    %p186 = scmp.ne.s32.totalorder %s181, %s183
    %p187 = scmp.eq.s32.totalorder %s16, 0
    %p188 = por %p186, %p187
    %p189 = scmp.ne.s32.totalorder %s181, %s183
    %p190 = scmp.eq.s32.totalorder %s21, 1
    %p191 = por %p189, %p190
    %p192 = scmp.ne.s32.totalorder %s183, %s184
    %p193 = scmp.eq.s32.totalorder %s21, 0
    %p194 = por %p192, %p193
    %p195 = scmp.ne.s32.totalorder %s183, %s184
    %p196 = scmp.eq.s32.totalorder %s22, 1
    %p197 = por %p195, %p196
    %p199 = scmp.ne.s32.totalorder %s184, %s198
    %p200 = scmp.eq.s32.totalorder %s22, 0
    %p201 = por %p199, %p200
    %s203 = sadd.s32 %s202, 1
    %p206 = scmp.eq.s32.totalorder %s16, 1
    %p207 = scmp.ne.s32.totalorder %s202, %s204
    %p208 = scmp.eq.s32.totalorder %s16, 0
    %p209 = por %p207, %p208
    %p210 = scmp.ne.s32.totalorder %s202, %s204
    %p211 = scmp.eq.s32.totalorder %s21, 1
    %p212 = por %p210, %p211
    %p213 = scmp.ne.s32.totalorder %s204, %s205
    %p214 = scmp.eq.s32.totalorder %s21, 0
    %p215 = por %p213, %p214
    %p216 = scmp.ne.s32.totalorder %s204, %s205
    %p217 = scmp.eq.s32.totalorder %s22, 1
    %p218 = por %p216, %p217
    %p220 = scmp.ne.s32.totalorder %s205, %s219
    %p221 = scmp.eq.s32.totalorder %s22, 0
    %p222 = por %p220, %p221
    %s223 = ssub.s32 %s16, %s23
    %p224 = scmp.eq.s32.totalorder %s223, 0
    %s226 = sadd.s32 %s225, 1
    %s227 = scalar_select %p224, %s225, %s226
    %p230 = pneg %p224
    %p231 = scmp.eq.s32.totalorder %s16, 1
    %p232 = por %p230, %p231
    %p233 = scmp.ne.s32.totalorder %s225, %s228
    %p234 = scmp.eq.s32.totalorder %s16, 0
    %p235 = por %p233, %p234
    %p236 = scmp.ne.s32.totalorder %s225, %s228
    %p237 = scmp.eq.s32.totalorder %s21, 1
    %p238 = por %p236, %p237
    %p239 = scmp.ne.s32.totalorder %s228, %s229
    %p240 = scmp.eq.s32.totalorder %s21, 0
    %p241 = por %p239, %p240
    %p242 = scmp.ne.s32.totalorder %s228, %s229
    %p243 = scmp.eq.s32.totalorder %s22, 1
    %p244 = por %p242, %p243
    %p246 = scmp.ne.s32.totalorder %s229, %s245
    %p247 = scmp.eq.s32.totalorder %s22, 0
    %p248 = por %p246, %p247
    %p249 = scmp.le.s32.totalorder 1, %s16
    %p250 = scmp.lt.s32.totalorder %s16, 3
    %p251 = pnand %p249, %p250
    %p252 = pneg %p251
    // Predicated region
    $region9: #{soft_q_forward.1} parent=5 // pred_check
      _
    $region10: #{soft_q_forward.1} parent=5 // pred_check_branch
      %254 = sbr.rel (%p251) target = $region12
    $region11: #{soft_q_forward.1} parent=5 // pred_region
      %s255 = ssub.s32 %s16, 1
      // Predicated region
      $region13: #{soft_q_forward.1} parent=11 // pred_check
        %p256 = pneg %p89
      $region14: #{soft_q_forward.1} parent=11 // pred_check_branch
        %258 = sbr.rel (%p256) target = $region16
      $region15: #{soft_q_forward.1} parent=11 // pred_region
        _
      $region16: #{soft_q_forward.1} parent=11 // pred_fallthru
        _
      // Predicated region
      $region17: #{soft_q_forward.1} parent=11 // pred_check
        %p259 = pneg %p110
      $region18: #{soft_q_forward.1} parent=11 // pred_check_branch
        %261 = sbr.rel (%p259) target = $region20
      $region19: #{soft_q_forward.1} parent=11 // pred_region
        _
      $region20: #{soft_q_forward.1} parent=11 // pred_fallthru
        _
      // Predicated region
      $region21: #{soft_q_forward.1} parent=11 // pred_check
        %p262 = pneg %p131
      $region22: #{soft_q_forward.1} parent=11 // pred_check_branch
        %264 = sbr.rel (%p262) target = $region24
      $region23: #{soft_q_forward.1} parent=11 // pred_region
        _
      $region24: #{soft_q_forward.1} parent=11 // pred_fallthru
        _
      // Predicated region
      $region25: #{soft_q_forward.1} parent=11 // pred_check
        %p265 = pneg %p152
      $region26: #{soft_q_forward.1} parent=11 // pred_check_branch
        %267 = sbr.rel (%p265) target = $region28
      $region27: #{soft_q_forward.1} parent=11 // pred_region
        _
      $region28: #{soft_q_forward.1} parent=11 // pred_fallthru
        _
      // Predicated region
      $region29: #{soft_q_forward.1} parent=11 // pred_check
        %p268 = pneg %p173
      $region30: #{soft_q_forward.1} parent=11 // pred_check_branch
        %270 = sbr.rel (%p268) target = $region32
      $region31: #{soft_q_forward.1} parent=11 // pred_region
        _
      $region32: #{soft_q_forward.1} parent=11 // pred_fallthru
        _
      // Predicated region
      $region33: #{soft_q_forward.1} parent=11 // pred_check
        %p271 = pneg %p194
      $region34: #{soft_q_forward.1} parent=11 // pred_check_branch
        %273 = sbr.rel (%p271) target = $region36
      $region35: #{soft_q_forward.1} parent=11 // pred_region
        _
      $region36: #{soft_q_forward.1} parent=11 // pred_fallthru
        _
      // Predicated region
      $region37: #{soft_q_forward.1} parent=11 // pred_check
        %p274 = pneg %p215
      $region38: #{soft_q_forward.1} parent=11 // pred_check_branch
        %276 = sbr.rel (%p274) target = $region40
      $region39: #{soft_q_forward.1} parent=11 // pred_region
        _
      $region40: #{soft_q_forward.1} parent=11 // pred_fallthru
        _
    $region12: #{soft_q_forward.1} parent=5 // pred_fallthru
      _
    %p277 = scmp.lt.s32.totalorder %s16, 2
    // Predicated region
    $region41: #{soft_q_forward.1} parent=5 // pred_check
      %p278 = pneg %p277
    $region42: #{soft_q_forward.1} parent=5 // pred_check_branch
      %280 = sbr.rel (%p278) target = $region44
    $region43: #{soft_q_forward.1} parent=5 // pred_region
      // Predicated region
      $region45: #{soft_q_forward.1} parent=43 // pred_check
        %p281 = pneg %p36
      $region46: #{soft_q_forward.1} parent=43 // pred_check_branch
        %283 = sbr.rel (%p281) target = $region48
      $region47: #{soft_q_forward.1} parent=43 // pred_region
        %p284 = scmp.lt.s32.totalorder %s16, 1
        %s285 = scalar_select %p284, %s16, 1
        %s286 = smul.addr %s285, 8
        %s287 = scalar_lea.vmem %s0, %s286
      $region48: #{soft_q_forward.1} parent=43 // pred_fallthru
        _
      // Predicated region
      $region49: #{soft_q_forward.1} parent=43 // pred_check
        %p288 = pneg %p62
      $region50: #{soft_q_forward.1} parent=43 // pred_check_branch
        %290 = sbr.rel (%p288) target = $region52
      $region51: #{soft_q_forward.1} parent=43 // pred_region
        %p291 = scmp.lt.s32.totalorder %s16, 1
        %s292 = scalar_select %p291, %s16, 1
        %s293 = smul.addr %s292, 8
        %s294 = scalar_lea.vmem %s1, %s293
      $region52: #{soft_q_forward.1} parent=43 // pred_fallthru
        _
    $region44: #{soft_q_forward.1} parent=5 // pred_fallthru
      _
    %p295 = scmp.le.s32.totalorder 1, %s16
    %p296 = scmp.lt.s32.totalorder %s16, 3
    %p297 = pnand %p295, %p296
    %p298 = pneg %p297
    // Predicated region
    $region53: #{soft_q_forward.1} parent=5 // pred_check
      _
    $region54: #{soft_q_forward.1} parent=5 // pred_check_branch
      %300 = sbr.rel (%p297) target = $region56
    $region55: #{soft_q_forward.1} parent=5 // pred_region
      %s301 = ssub.s32 %s16, 1
      %p302 = scmp.lt.s32.totalorder %s21, 1
      %s303 = scalar_select %p302, %s21, 1
      %s304 = smul.addr %s303, 8
      %s305 = scalar_lea.vmem %s0, %s304
      %p306 = pneg %p42
      %p307 = pneg %p39
      %p308 = scmp.lt.s32.totalorder %s21, 1
      %s309 = scalar_select %p308, %s21, 1
      %s310 = smul.addr %s309, 8
      %s311 = scalar_lea.vmem %s1, %s310
      %p312 = pneg %p68
      %p313 = pneg %p65
      %p314 = pneg %p89
      %p315 = pneg %p86
      %p316 = pneg %p110
      %p317 = pneg %p107
      %p318 = pneg %p131
      %p319 = pneg %p128
      %p320 = pneg %p152
      %p321 = pneg %p149
      %p322 = pneg %p173
      %p323 = pneg %p170
      %p324 = pneg %p194
      %p325 = pneg %p191
      %p326 = pneg %p215
      %p327 = pneg %p212
      %p328 = pneg %p241
      %p329 = pneg %p238
      %p330 = scmp.lt.s32.totalorder %s21, 1
      %s331 = scalar_select %p330, %s21, 1
      %s332 = scalar_lea.vmem %s9, %s331
      %p333 = scmp.lt.s32.totalorder %s21, 1
      %s334 = scalar_select %p333, %s21, 1
      %s335 = smul.addr %s334, 8
      %s336 = scalar_lea.vmem %s0, %s335
      %p337 = scmp.lt.s32.totalorder %s21, 1
      %s338 = scalar_select %p337, %s21, 1
      %s339 = smul.addr %s338, 8
      %s340 = scalar_lea.vmem %s1, %s339
      %p341 = scmp.lt.s32.totalorder %s21, 1
      %s342 = scalar_select %p341, %s21, 1
      %s343 = scalar_lea.vmem %s9, %s342
      %v345 = vld [vmem:[%s336] sm:$0xff]
      %v346 = vpack.c.bf16 %v345, %v345
      %v347 = vld [vmem:[%s340] sm:$0xff]
      %v348 = vpack.c.bf16 %v347, %v347
      %v349 = vld [vmem:[%s2] sm:$0xf]
      %v350 = vld [vmem:[%s3] sm:$0x3]
      %vm351 = vcmask 31744
      %v353 = vsel %vm351, %v348, 0
      %vm355 = vcmask 1041408
      %v357 = vsel %vm355, %v350, 0
      %359 = vmatpush.bf16.msra.mxu0 0
      %360 = vmatpush.bf16.msra.mxu0 0
      %361 = vmatpush.bf16.msra.mxu0 0
      %362 = vmatpush.bf16.msra.mxu0 0
      %363 = vmatpush.bf16.msra.mxu0 0
      %364 = vmatpush.bf16.msra.mxu0 0
      %365 = vmatpush.bf16.msra.mxu0 0
      %366 = vmatpush.bf16.msra.mxu0 %v357
      %367 = vmatmul.bf16.gmra.mxu0 %v353
      %v368 = vpop.f32.mrf.mxu0
      %v369 = vadd.f32 0.0, %v368
      %v370 = vpop.f32.mrf.mxu0
      %371 = vdwg.mxu0
      %vm372 = vcmask 64512
      %v374 = vsel %vm372, %v346, 0
      %vm376 = vcmask 1043456
      %v378 = vsel %vm376, %v349, 0
      %380 = vmatpush.bf16.msra.mxu0 0
      %381 = vmatpush.bf16.msra.mxu0 0
      %382 = vmatpush.bf16.msra.mxu0 0
      %383 = vmatpush.bf16.msra.mxu0 0
      %384 = vmatpush.bf16.msra.mxu0 0
      %385 = vmatpush.bf16.msra.mxu0 0
      %386 = vmatpush.bf16.msra.mxu0 0
      %387 = vmatpush.bf16.msra.mxu0 %v378
      %388 = vmatmul.bf16.gmra.mxu0 %v374
      %v389 = vpop.f32.mrf.mxu0
      %v390 = vadd.f32 %v369, %v389
      %v391 = vpop.f32.mrf.mxu0
      %392 = vdwg.mxu0
      %v393 = vld [vmem:[%s4] sm:$0x1]
      %v395 = vperm.slane %v393, 0
      %v397 = vadd.f32 %v390, %v395
      %v398 = vmax.f32 %v397, 0.0
      %v399 = vpack.c.bf16 %v398, %v398
      %v400 = vld [vmem:[%s5] sm:$0xf]
      %v401 = vld [vmem:[%s5 + $0x4] sm:$0xf]
      %v402 = vld [vmem:[%s5 + $0x8] sm:$0xf]
      %v403 = vld [vmem:[%s5 + $0xc] sm:$0xf]
      %v404 = vld [vmem:[%s6] sm:$0x1]
      %v406 = vperm.slane %v404, 0
      %v412 = vunpack.c.l.b16 %v400
      %v413 = vunpack.c.l.b16 %v401
      %v414 = vunpack.c.l.b16 %v402
      %v415 = vunpack.c.l.b16 %v403
      %v416 = vpack.c.b16 %v413, %v412
      %v417 = vpack.c.b16 %v415, %v414
      %vm420 = vcmask 261120
      %v422 = vsel %vm420, %v399, 0
      %424 = vmatpush.bf16.msra.mxu0 0
      %425 = vmatpush.bf16.msra.mxu0 0
      %426 = vmatpush.bf16.msra.mxu0 0
      %427 = vmatpush.bf16.msra.mxu0 0
      %428 = vmatpush.bf16.msra.mxu0 0
      %429 = vmatpush.bf16.msra.mxu0 0
      %430 = vmatpush.bf16.msra.mxu0 %v417
      %431 = vmatpush.bf16.msra.mxu0 %v416
      %432 = vmatmul.bf16.gmra.mxu0 %v422
      %v433 = vpop.f32.mrf.mxu0
      %v434 = vadd.f32 %v406, %v433
      %v435 = vpop.f32.mrf.mxu0
      %436 = vdwg.mxu0
      %v437 = vmax.f32 %v434, 0.0
      %v438 = vld [vmem:[%s7] sm:$0x1]
      %v440 = vperm.slane %v438, 0
      %v442 = vmul.f32 %v437, %v440
      %v443 = vsel %vm420, %v442, 0.0
      %444 = vadd.xlane.f32.xlu0 %v443
      %v445 = vpop.xlane.xlu0 %444
      %s446 = sld [smem:[#allocation2]]
      %v447 = vstv %s446
      %v448 = vadd.f32 %v445, %v447
      %v450 = vlaneseq
      %v451 = vand.u32 %v450, 127
      %v452 = vperm.slane %v448, %v451
      %vm454 = vcmask 57344
      %455 = vst.msk [vmem:[%s343] sm:$0x1] %vm454, %v452
      %p456 = scmp.lt.s32.totalorder %s21, 1
      %s457 = scalar_select %p456, %s21, 1
      %s458 = scalar_lea.vmem %s9, %s457
      // Predicated region
      $region57: #{soft_q_forward.1} parent=55 // pred_check
        %p459 = pneg %p238
      $region58: #{soft_q_forward.1} parent=55 // pred_check_branch
        %461 = sbr.rel (%p459) target = $region60
      $region59: #{soft_q_forward.1} parent=55 // pred_region
        _
      $region60: #{soft_q_forward.1} parent=55 // pred_fallthru
        _
    $region56: #{soft_q_forward.1} parent=5 // pred_fallthru
      _
    %p462 = scmp.le.s32.totalorder 2, %s16
    // Predicated region
    $region61: #{soft_q_forward.1} parent=5 // pred_check
      %p463 = pneg %p462
    $region62: #{soft_q_forward.1} parent=5 // pred_check_branch
      %465 = sbr.rel (%p463) target = $region64
    $region63: #{soft_q_forward.1} parent=5 // pred_region
      %s466 = ssub.s32 %s16, 2
      // Predicated region
      $region65: #{soft_q_forward.1} parent=63 // pred_check
        %p467 = pneg %p244
      $region66: #{soft_q_forward.1} parent=63 // pred_check_branch
        %469 = sbr.rel (%p467) target = $region68
      $region67: #{soft_q_forward.1} parent=63 // pred_region
        %p470 = scmp.lt.s32.totalorder %s22, 1
        %s471 = scalar_select %p470, %s22, 1
        %s472 = scalar_lea.vmem %s9, %s471
      $region68: #{soft_q_forward.1} parent=63 // pred_fallthru
        _
    $region64: #{soft_q_forward.1} parent=5 // pred_fallthru
      _
  $region6: #{soft_q_forward.1} parent=0 // loop_footer
    %s20 = sadd.s32 1, %s16
  $region7: #{soft_q_forward.1} parent=0 // loop_footer_branch
    %15 = sbr.rel target = $region3
  $region8: #{soft_q_forward.1} parent=0 // loop_exit
    _

</llo_original>
